<compile_context>
chip_gen: v6e
topology: v6e:2x2x1
jax: 0.10.0
libtpu: 0.0.40
codegen_flags: <defaults>
</compile_context>

<pallas_src>
import functools

import jax
import jax.numpy as jnp
import numpy as np
from jax.experimental import pallas as pl
from jax.experimental.pallas import tpu as pltpu

_MIB = 1024 * 1024


def _interp_matrix(out_size: int, in_size: int, align_corners: bool) -> np.ndarray:
    """Row-interpolation matrix matching torch.nn.functional.interpolate(bilinear)."""
    if align_corners:
        if out_size > 1:
            src = np.arange(out_size, dtype=np.float64) * (in_size - 1) / (out_size - 1)
        else:
            # PyTorch align_corners=True, out_size == 1 -> index 0
            src = np.zeros((1,), dtype=np.float64)
    else:
        # half-pixel centers (PyTorch align_corners=False convention)
        src = (np.arange(out_size, dtype=np.float64) + 0.5) * (in_size / out_size) - 0.5
        src = np.clip(src, 0.0, in_size - 1)
    lo = np.clip(np.floor(src).astype(np.int64), 0, in_size - 1)
    hi = np.clip(lo + 1, 0, in_size - 1)
    frac = src - lo
    W = np.zeros((out_size, in_size), dtype=np.float32)
    rows = np.arange(out_size)
    np.add.at(W, (rows, lo), (1.0 - frac).astype(np.float32))
    np.add.at(W, (rows, hi), frac.astype(np.float32))
    return W


@functools.lru_cache(maxsize=None)
def _cached_weights(h_in, w_in, h_out, w_out, align_corners, h_dtype_str):
    """Memoized device copies of the (transposed) interpolation matrices.

    wht (height pass) is kept in the input dtype so bf16 inputs run a native
    bf16 MXU matmul without casting x; wwt (width pass) stays f32 because the
    intermediate is an f32 accumulator (single rounding at the final store).
    """
    wht = _interp_matrix(h_out, h_in, align_corners).T   # (H_in, H_out)
    wwt = _interp_matrix(w_out, w_in, align_corners).T   # (W_in, W_out)
    return (jnp.asarray(wht, dtype=jnp.dtype(h_dtype_str)),
            jnp.asarray(wwt, dtype=jnp.float32))


def _round_up(a, b):
    return (a + b - 1) // b * b


def _per_plane_vmem_bytes(h_in, w_in, h_out, w_out, itemsize):
    """VMEM per channel-plane: double-buffered in/out blocks + f32 intermediates."""
    ru = _round_up
    in_b = ru(h_in, 8) * ru(w_in, 128) * itemsize
    out_b = ru(h_out, 8) * ru(w_out, 128) * itemsize
    f32 = 4
    interm = (ru(w_in, 8) * ru(h_in, 128)      # xt  (transposed input)
              + ru(w_in, 8) * ru(h_out, 128)   # t   (height-pass result, f32)
              + ru(h_out, 8) * ru(w_in, 128)   # t^T (pre-width-pass, f32)
              + ru(h_out, 8) * ru(w_out, 128)  # o   (f32 result)
              ) * f32
    return 2 * (in_b + out_b) + interm


def _pick_block_channels(nc, h_in, w_in, h_out, w_out, itemsize, budget_bytes):
    """Largest divisor of nc that fits the VMEM budget, preferring >=2 even grid steps.

    bc*h_out must be a multiple of 8 (output block sublane dim) unless bc == nc.
    """
    per_plane = _per_plane_vmem_bytes(h_in, w_in, h_out, w_out, itemsize)
    cap = max(1, budget_bytes // per_plane)

    divisors = [d for d in range(1, nc + 1) if nc % d == 0]
    valid = [d for d in divisors if (d * h_out) % 8 == 0 or d == nc]
    fitting = [d for d in valid if d <= cap]
    if not fitting:
        return min(valid), per_plane

    even_steps = [d for d in fitting if (nc // d) >= 2 and (nc // d) % 2 == 0]
    ge2_steps = [d for d in fitting if (nc // d) >= 2]
    if even_steps:
        return max(even_steps), per_plane
    if ge2_steps:
        return max(ge2_steps), per_plane
    return max(fitting), per_plane


def _interp_kernel(x_ref, wht_ref, wwt_ref, o_ref):
    # x_ref:   (Bc, H_in, W_in)
    # wht_ref: (H_in, H_out)   = W_h^T   (input dtype)
    # wwt_ref: (W_in, W_out)   = W_w^T   (f32)
    # o_ref:   (Bc*H_out, W_out)         -- natural layout of the 2nd matmul
    bc, h_in, w_in = x_ref.shape
    h_out = wht_ref.shape[1]

    x = x_ref[...]
    # --- height pass: one big matmul, M = Bc*W_in, f32 accumulation ---
    xt = jnp.swapaxes(x, 1, 2).reshape(bc * w_in, h_in)                  # (Bc*W_in, H_in)
    t = jnp.dot(xt, wht_ref[...], preferred_element_type=jnp.float32)    # (Bc*W_in, H_out) f32
    # --- width pass: one big matmul, M = Bc*H_out, stays in f32 ---
    t = jnp.swapaxes(t.reshape(bc, w_in, h_out), 1, 2).reshape(bc * h_out, w_in)
    o = jnp.dot(t, wwt_ref[...], preferred_element_type=jnp.float32)     # (Bc*H_out, W_out)
    # single cast at the final store; no reshape needed (o already matches o_ref)
    o_ref[...] = o.astype(o_ref.dtype)


def interpolate_bilinear(x: jax.Array, scale_factor: float = 2.0,
                         align_corners: bool = False) -> jax.Array:
    """Pallas equivalent of Interpolate(scale_factor, mode='bilinear', align_corners)."""
    n, c, h, w = x.shape
    h_out = int(np.floor(h * scale_factor))
    w_out = int(np.floor(w * scale_factor))
    nc = n * c
    itemsize = jnp.dtype(x.dtype).itemsize

    # Height-pass weights in the input dtype (native bf16 MXU for bf16 inputs);
    # width-pass weights stay f32 (intermediate is an f32 accumulator).
    h_dtype = "bfloat16" if x.dtype == jnp.dtype(jnp.bfloat16) else "float32"
    wht, wwt = _cached_weights(h, w, h_out, w_out, bool(align_corners), h_dtype)

    budget = 24 * _MIB   # per-step VMEM (blocks double-buffered + f32 intermediates)
    bc, per_plane = _pick_block_channels(nc, h, w, h_out, w_out, itemsize, budget)
    grid = (nc // bc,)

    # Explicit scoped-VMEM limit: covers the real footprint (incl. intermediates),
    # above v5e's 16 MiB default, below v7x's 64 MiB physical VMEM.
    w_bytes = (_round_up(h, 8) * _round_up(h_out, 128) * jnp.dtype(wht.dtype).itemsize
               + _round_up(w, 8) * _round_up(w_out, 128) * 4)
    est_vmem = bc * per_plane + 2 * w_bytes
    vmem_limit = int(min(48 * _MIB, max(32 * _MIB, int(est_vmem * 1.4))))

    x_flat = x.reshape(nc, h, w)

    # Output as a 2-D (nc*H_out, W_out) slab: exactly the second matmul's layout,
    # so there is no in-kernel reshape before the store; wrapper reshape is free.
    out_shape = jax.ShapeDtypeStruct((nc * h_out, w_out), x.dtype)
    out_spec = pl.BlockSpec((bc * h_out, w_out), lambda i: (i, 0))

    cost = pl.CostEstimate(
        flops=2 * nc * (h * w * h_out + w * h_out * w_out),
        transcendentals=0,
        bytes_accessed=nc * (h * w + h_out * w_out) * itemsize + 2 * w_bytes,
    )

    out = pl.pallas_call(
        _interp_kernel,
        out_shape=out_shape,
        grid_spec=pltpu.PrefetchScalarGridSpec(
            num_scalar_prefetch=0,
            grid=grid,
            in_specs=[
                pl.BlockSpec((bc, h, w), lambda i: (i, 0, 0)),
                pl.BlockSpec(wht.shape, lambda i: (0, 0)),
                pl.BlockSpec(wwt.shape, lambda i: (0, 0)),
            ],
            out_specs=out_spec,
        ),
        compiler_params=pltpu.CompilerParams(
            dimension_semantics=("parallel",),
            vmem_limit_bytes=vmem_limit),
        cost_estimate=cost,
    )(x_flat, wht, wwt)

    return out.reshape(n, c, h_out, w_out)


if __name__ == "__main__":
    key = jax.random.PRNGKey(0)
    x = jax.random.normal(key, (2, 4, 16, 16), dtype=jnp.float32)

    interp = jax.jit(interpolate_bilinear,
                     static_argnames=("scale_factor", "align_corners"))
    y = interp(x, scale_factor=2.0, align_corners=False)
    y = jax.block_until_ready(y)
    assert y.shape == (2, 4, 32, 32)

    # sanity check against jax.image.resize (same half-pixel convention as
    # PyTorch's align_corners=False bilinear; valid for upscaling, where
    # anti-aliasing is a no-op)
    ref = jax.image.resize(x, (2, 4, 32, 32), method="bilinear")
    np.testing.assert_allclose(np.asarray(y), np.asarray(ref), rtol=1e-5, atol=1e-5)

    print("KERNEL_OK")
</pallas_src>

<mosaic_0001>
module attributes {stable_mosaic.version = 11 : i64} {
  func.func @_interp_kernel(%arg0: i32, %arg1: memref<4x16x16xf32, #tpu.memory_space<vmem>>, %arg2: memref<16x32xf32, #tpu.memory_space<vmem>>, %arg3: memref<16x32xf32, #tpu.memory_space<vmem>>, %arg4: memref<128x32xf32, #tpu.memory_space<vmem>>) attributes {dimension_semantics = [#tpu.dimension_semantics<parallel>], iteration_bounds = array<i64: 2>, scalar_prefetch = 0 : i64, scratch_operands = 0 : i64, tpu.core_type = #tpu.core_type<tc>, window_params = [{transform_indices = @transform_0, window_bounds = array<i64: 4, 16, 16>}, {pipeline_mode = #tpu.pipeline_mode<synchronous>, transform_indices = @transform_1, window_bounds = array<i64: 16, 32>}, {pipeline_mode = #tpu.pipeline_mode<synchronous>, transform_indices = @transform_2, window_bounds = array<i64: 16, 32>}, {transform_indices = @transform_3, window_bounds = array<i64: 128, 32>}]} {
    %c0 = arith.constant 0 : index
    %c0_0 = arith.constant 0 : index
    %c0_1 = arith.constant 0 : index
    %0 = vector.load %arg1[%c0, %c0_0, %c0_1] : memref<4x16x16xf32, #tpu.memory_space<vmem>>, vector<4x16x16xf32>
    %1 = tpu.transpose %0, [0, 2, 1] : vector<4x16x16xf32> -> vector<4x16x16xf32>
    %2 = vector.shape_cast %1 : vector<4x16x16xf32> to vector<64x16xf32>
    %c0_2 = arith.constant 0 : index
    %c0_3 = arith.constant 0 : index
    %3 = vector.load %arg2[%c0_2, %c0_3] : memref<16x32xf32, #tpu.memory_space<vmem>>, vector<16x32xf32>
    %cst = arith.constant dense<0.000000e+00> : vector<64x32xf32>
    %4 = tpu.matmul %2, %3, %cst {dimension_numbers = #tpu.dot_dimension_numbers<[1], [0], [0], [1], [0, 0, 1, 1], [], []>} : vector<64x16xf32>, vector<16x32xf32>, vector<64x32xf32> -> vector<64x32xf32>
    %5 = vector.shape_cast %4 : vector<64x32xf32> to vector<4x16x32xf32>
    %6 = tpu.transpose %5, [0, 2, 1] : vector<4x16x32xf32> -> vector<4x32x16xf32>
    %7 = vector.shape_cast %6 : vector<4x32x16xf32> to vector<128x16xf32>
    %c0_4 = arith.constant 0 : index
    %c0_5 = arith.constant 0 : index
    %8 = vector.load %arg3[%c0_4, %c0_5] : memref<16x32xf32, #tpu.memory_space<vmem>>, vector<16x32xf32>
    %cst_6 = arith.constant dense<0.000000e+00> : vector<128x32xf32>
    %9 = tpu.matmul %7, %8, %cst_6 {dimension_numbers = #tpu.dot_dimension_numbers<[1], [0], [0], [1], [0, 0, 1, 1], [], []>} : vector<128x16xf32>, vector<16x32xf32>, vector<128x32xf32> -> vector<128x32xf32>
    %c0_7 = arith.constant 0 : index
    %c0_8 = arith.constant 0 : index
    %10 = vector.load %arg4[%c0_7, %c0_8] : memref<128x32xf32, #tpu.memory_space<vmem>>, vector<128x32xf32>
    tpu.vector_store %arg4[%c0_7, %c0_8], %9 {strides = array<i32>} : memref<128x32xf32, #tpu.memory_space<vmem>>, vector<128x32xf32>,
    return
  }
  func.func @transform_0(%arg0: i32) -> (i32, i32, i32) {
    %c0_i32 = arith.constant 0 : i32
    %c0_i32_0 = arith.constant 0 : i32
    %c0_i32_1 = arith.constant 0 : i32
    return %arg0, %c0_i32, %c0_i32_0 : i32, i32, i32
  }
  func.func @transform_1(%arg0: i32) -> (i32, i32) {
    %c0_i32 = arith.constant 0 : i32
    %c0_i32_0 = arith.constant 0 : i32
    %c0_i32_1 = arith.constant 0 : i32
    return %c0_i32, %c0_i32_0 : i32, i32
  }
  func.func @transform_2(%arg0: i32) -> (i32, i32) {
    %c0_i32 = arith.constant 0 : i32
    %c0_i32_0 = arith.constant 0 : i32
    %c0_i32_1 = arith.constant 0 : i32
    return %c0_i32, %c0_i32_0 : i32, i32
  }
  func.func @transform_3(%arg0: i32) -> (i32, i32) {
    %c0_i32 = arith.constant 0 : i32
    %c0_i32_0 = arith.constant 0 : i32
    return %arg0, %c0_i32 : i32, i32
  }
}

</mosaic_0001>

<llo_original>
// kernel: interpolate_bilinear.1
$region0: #{interpolate_bilinear.1}
  #allocation0 [shape = 'u32[]', space=smem, size = 0x4, offset = 0x4, fixed_abs, tag = 'smem constant byte address 0x4 - core index']
  #allocation1 [shape = 'u32[144,128]{1,0:T(1,128)}', space=vmem, size = 0x12000, scoped, tag = 'internal scratch']
  %s0 = inlined_call_operand.hbm [shape: f32[8,16,16], index: 0, kind: input, shape index: {}]
  %s1 = inlined_call_operand.hbm [shape: f32[16,32], index: 1, kind: input, shape index: {}, may-alias: {1,2}]
  %s2 = inlined_call_operand.hbm [shape: f32[16,32], index: 2, kind: input, shape index: {}, may-alias: {1,2}]
  %s3 = inlined_call_operand.hbm [shape: f32[256,32], index: 3, kind: output, shape index: {}]
  %s4 = sld [smem:[#allocation0]]
  $region57: #{interpolate_bilinear.1} parent=0
    _
  %s6 = ssub.s32 1, %s4
  %s7 = scalar_select 0, %s6, %s4
  $region1: #{interpolate_bilinear.1} parent=0
    #allocation2 [shape = 'u8[65536]{0}', space=vmem, size = 0x10000, scoped, tag = 'input window, operand 0']
    #allocation3 [shape = 's32[2]{0}', space=sflag, size = 0x8, scoped, tag = 'scoped memory for interpolate_bilinear.1']
    #allocation4 [shape = 's32[2]{0}', space=sflag, size = 0x8, scoped, tag = 'scoped memory for interpolate_bilinear.1']
    #allocation5 [shape = 'u8[8192]{0}', space=vmem, size = 0x2000, scoped, tag = 'input window, operand 1, single buffered']
    #allocation6 [shape = 's32[1]{0}', space=sflag, size = 0x4, scoped, tag = 'scoped memory for interpolate_bilinear.1']
    #allocation7 [shape = 'u8[8192]{0}', space=vmem, size = 0x2000, scoped, tag = 'input window, operand 2, single buffered']
    #allocation8 [shape = 'u8[131072]{0}', space=vmem, size = 0x20000, scoped, tag = 'output window, operand 0']
    %8 = vsyncpa [#allocation3], 0
    %s9 = scalar_lea.sflag [#allocation3], 1
    %10 = vsyncpa %s9, 0
    %11 = vsyncpa [#allocation6], 0
    %12 = vsyncpa [#allocation4], 0
    %s13 = scalar_lea.sflag [#allocation4], 1
    %14 = vsyncpa %s13, 0
    loop: start=0, step=1, limit=4
    $region2: #{interpolate_bilinear.1} parent=1 // loop_pre_header
      _
    $region3: #{interpolate_bilinear.1} parent=1 // loop_header
      %s16 = sphi 0, %s20
      %p17 = scmp.ge.s32.totalorder %s16, 4
      %s26 = sphi 0, %s28
      %s29 = sphi 0, %s26
      %s30 = sphi 0, %s29
      %s46 = sphi 0, %s30
      %s50 = sphi 0, %s50
      %s52 = sphi 0, %s50
      %s53 = sphi 0, %s52
      %s67 = sphi 0, %s53
      %s71 = sphi 0, %s71
      %s73 = sphi 0, %s71
      %s74 = sphi 0, %s73
      %s88 = sphi 0, %s74
      %s94 = sphi 0, %s96
      %s97 = sphi 0, %s94
      %s98 = sphi 0, %s97
      %s114 = sphi 0, %s98
    $region4: #{interpolate_bilinear.1} parent=1 // loop_header_branch
      %19 = sbr.rel (%p17) target = $region8
    $region5: #{interpolate_bilinear.1} parent=1 // loop_body
      %s21 = ssub.s32 %s16, 1
      %s22 = ssub.s32 %s16, 2
      %s23 = sadd.s32 %s16, 1
      %s24 = ssub.s32 %s16, %s23
      %p25 = scmp.eq.s32.totalorder %s24, 0
      %s27 = sadd.s32 %s26, 1
      %s28 = scalar_select %p25, %s26, %s27
      %p31 = pneg %p25
      %p32 = scmp.eq.s32.totalorder %s16, 1
      %p33 = por %p31, %p32
      %p34 = scmp.ne.s32.totalorder %s26, %s29
      %p35 = scmp.eq.s32.totalorder %s16, 0
      %p36 = por %p34, %p35
      %p37 = scmp.ne.s32.totalorder %s26, %s29
      %p38 = scmp.eq.s32.totalorder %s21, 1
      %p39 = por %p37, %p38
      %p40 = scmp.ne.s32.totalorder %s29, %s30
      %p41 = scmp.eq.s32.totalorder %s21, 0
      %p42 = por %p40, %p41
      %p43 = scmp.ne.s32.totalorder %s29, %s30
      %p44 = scmp.eq.s32.totalorder %s22, 1
      %p45 = por %p43, %p44
      %p47 = scmp.ne.s32.totalorder %s30, %s46
      %p48 = scmp.eq.s32.totalorder %s22, 0
      %p49 = por %p47, %p48
      %s51 = sadd.s32 %s50, 1
      %p54 = scmp.eq.s32.totalorder %s16, 1
      %p55 = scmp.ne.s32.totalorder %s50, %s52
      %p56 = scmp.eq.s32.totalorder %s16, 0
      %p57 = por %p55, %p56
      %p58 = scmp.ne.s32.totalorder %s50, %s52
      %p59 = scmp.eq.s32.totalorder %s21, 1
      %p60 = por %p58, %p59
      %p61 = scmp.ne.s32.totalorder %s52, %s53
      %p62 = scmp.eq.s32.totalorder %s21, 0
      %p63 = por %p61, %p62
      %p64 = scmp.ne.s32.totalorder %s52, %s53
      %p65 = scmp.eq.s32.totalorder %s22, 1
      %p66 = por %p64, %p65
      %p68 = scmp.ne.s32.totalorder %s53, %s67
      %p69 = scmp.eq.s32.totalorder %s22, 0
      %p70 = por %p68, %p69
      %s72 = sadd.s32 %s71, 1
      %p75 = scmp.eq.s32.totalorder %s16, 1
      %p76 = scmp.ne.s32.totalorder %s71, %s73
      %p77 = scmp.eq.s32.totalorder %s16, 0
      %p78 = por %p76, %p77
      %p79 = scmp.ne.s32.totalorder %s71, %s73
      %p80 = scmp.eq.s32.totalorder %s21, 1
      %p81 = por %p79, %p80
      %p82 = scmp.ne.s32.totalorder %s73, %s74
      %p83 = scmp.eq.s32.totalorder %s21, 0
      %p84 = por %p82, %p83
      %p85 = scmp.ne.s32.totalorder %s73, %s74
      %p86 = scmp.eq.s32.totalorder %s22, 1
      %p87 = por %p85, %p86
      %p89 = scmp.ne.s32.totalorder %s74, %s88
      %p90 = scmp.eq.s32.totalorder %s22, 0
      %p91 = por %p89, %p90
      %s92 = ssub.s32 %s16, %s23
      %p93 = scmp.eq.s32.totalorder %s92, 0
      %s95 = sadd.s32 %s94, 1
      %s96 = scalar_select %p93, %s94, %s95
      %p99 = pneg %p93
      %p100 = scmp.eq.s32.totalorder %s16, 1
      %p101 = por %p99, %p100
      %p102 = scmp.ne.s32.totalorder %s94, %s97
      %p103 = scmp.eq.s32.totalorder %s16, 0
      %p104 = por %p102, %p103
      %p105 = scmp.ne.s32.totalorder %s94, %s97
      %p106 = scmp.eq.s32.totalorder %s21, 1
      %p107 = por %p105, %p106
      %p108 = scmp.ne.s32.totalorder %s97, %s98
      %p109 = scmp.eq.s32.totalorder %s21, 0
      %p110 = por %p108, %p109
      %p111 = scmp.ne.s32.totalorder %s97, %s98
      %p112 = scmp.eq.s32.totalorder %s22, 1
      %p113 = por %p111, %p112
      %p115 = scmp.ne.s32.totalorder %s98, %s114
      %p116 = scmp.eq.s32.totalorder %s22, 0
      %p117 = por %p115, %p116
      %p118 = scmp.le.s32.totalorder 1, %s16
      %p119 = scmp.lt.s32.totalorder %s16, 3
      %p120 = pnand %p118, %p119
      %p121 = pneg %p120
      // Predicated region
      $region9: #{interpolate_bilinear.1} parent=5 // pred_check
        _
      $region10: #{interpolate_bilinear.1} parent=5 // pred_check_branch
        %123 = sbr.rel (%p120) target = $region12
      $region11: #{interpolate_bilinear.1} parent=5 // pred_region
        %s124 = ssub.s32 %s16, 1
        // Predicated region
        $region13: #{interpolate_bilinear.1} parent=11 // pred_check
          %p125 = pneg %p63
        $region14: #{interpolate_bilinear.1} parent=11 // pred_check_branch
          %127 = sbr.rel (%p125) target = $region16
        $region15: #{interpolate_bilinear.1} parent=11 // pred_region
          %s129 = ssub.s32 256, 256
          %130 = vsyncadd [#allocation6], %s129
          %s131 = sshll.u32 [#allocation5], 4
          %s132 = int_to_ptr.vmem [resolvable:$true] %s131
          %137 = dma.hbm_to_vmem [thread:$0]  %s1, 256, %s132, [#allocation6], 128, 128, 8
        $region16: #{interpolate_bilinear.1} parent=11 // pred_fallthru
          _
        // Predicated region
        $region17: #{interpolate_bilinear.1} parent=11 // pred_check
          %p138 = pneg %p84
        $region18: #{interpolate_bilinear.1} parent=11 // pred_check_branch
          %140 = sbr.rel (%p138) target = $region20
        $region19: #{interpolate_bilinear.1} parent=11 // pred_region
          %s142 = ssub.s32 256, 256
          %143 = vsyncadd [#allocation6], %s142
          %s144 = sshll.u32 [#allocation7], 4
          %s145 = int_to_ptr.vmem [resolvable:$true] %s144
          %150 = dma.hbm_to_vmem [thread:$0]  %s2, 256, %s145, [#allocation6], 128, 128, 8
        $region20: #{interpolate_bilinear.1} parent=11 // pred_fallthru
          _
      $region12: #{interpolate_bilinear.1} parent=5 // pred_fallthru
        _
      %p151 = scmp.lt.s32.totalorder %s16, 2
      // Predicated region
      $region21: #{interpolate_bilinear.1} parent=5 // pred_check
        %p152 = pneg %p151
      $region22: #{interpolate_bilinear.1} parent=5 // pred_check_branch
        %154 = sbr.rel (%p152) target = $region24
      $region23: #{interpolate_bilinear.1} parent=5 // pred_region
        // Predicated region
        $region25: #{interpolate_bilinear.1} parent=23 // pred_check
          %p155 = pneg %p36
        $region26: #{interpolate_bilinear.1} parent=23 // pred_check_branch
          %157 = sbr.rel (%p155) target = $region28
        $region27: #{interpolate_bilinear.1} parent=23 // pred_region
          %s158 = sand.u32 %s26, 1
          %s159 = scalar_lea.sflag [#allocation3], %s158
          %s160 = sand.u32 %s26, 1
          %s161 = smul.addr %s160, 64
          %s162 = scalar_lea.vmem [#allocation2], %s161
          %s163 = smul.u32 4, %s16
          %s165 = ssub.s32 1024, 1024
          %166 = vsyncadd %s159, %s165
          %s167 = smul.addr %s163, 2
          %s168 = smul.addr %s167, 128
          %s169 = scalar_lea.hbm %s0, %s168
          %s170 = sshll.u32 %s162, 4
          %s171 = int_to_ptr.vmem [resolvable:$true] %s170
          %176 = dma.hbm_to_vmem [thread:$0]  %s169, 1024, %s171, %s159, 128, 128, 8
        $region28: #{interpolate_bilinear.1} parent=23 // pred_fallthru
          _
      $region24: #{interpolate_bilinear.1} parent=5 // pred_fallthru
        _
      %p177 = scmp.le.s32.totalorder 1, %s16
      %p178 = scmp.lt.s32.totalorder %s16, 3
      %p179 = pnand %p177, %p178
      %p180 = pneg %p179
      // Predicated region
      $region29: #{interpolate_bilinear.1} parent=5 // pred_check
        _
      $region30: #{interpolate_bilinear.1} parent=5 // pred_check_branch
        %182 = sbr.rel (%p179) target = $region32
      $region31: #{interpolate_bilinear.1} parent=5 // pred_region
        %s183 = ssub.s32 %s16, 1
        %s184 = sand.u32 %s29, 1
        %s185 = scalar_lea.sflag [#allocation3], %s184
        %s186 = sand.u32 %s29, 1
        %s187 = smul.addr %s186, 64
        %s188 = scalar_lea.vmem [#allocation2], %s187
        // Predicated region
        $region33: #{interpolate_bilinear.1} parent=31 // pred_check
          %p189 = pneg %p42
        $region34: #{interpolate_bilinear.1} parent=31 // pred_check_branch
          %191 = sbr.rel (%p189) target = $region36
        $region35: #{interpolate_bilinear.1} parent=31 // pred_region
          %192 = dma.done %s185, 1024
        $region36: #{interpolate_bilinear.1} parent=31 // pred_fallthru
          _
        // Predicated region
        $region37: #{interpolate_bilinear.1} parent=31 // pred_check
          %p193 = pneg %p63
        $region38: #{interpolate_bilinear.1} parent=31 // pred_check_branch
          %195 = sbr.rel (%p193) target = $region40
        $region39: #{interpolate_bilinear.1} parent=31 // pred_region
          %196 = dma.done [#allocation6], 256
        $region40: #{interpolate_bilinear.1} parent=31 // pred_fallthru
          _
        // Predicated region
        $region41: #{interpolate_bilinear.1} parent=31 // pred_check
          %p197 = pneg %p84
        $region42: #{interpolate_bilinear.1} parent=31 // pred_check_branch
          %199 = sbr.rel (%p197) target = $region44
        $region43: #{interpolate_bilinear.1} parent=31 // pred_region
          %200 = dma.done [#allocation6], 256
        $region44: #{interpolate_bilinear.1} parent=31 // pred_fallthru
          _
        %s201 = sand.u32 %s29, 1
        %s202 = scalar_lea.sflag [#allocation3], %s201
        %s203 = sand.u32 %s29, 1
        %s204 = smul.addr %s203, 64
        %s205 = scalar_lea.vmem [#allocation2], %s204
        %p206 = pneg %p42
        %p207 = pneg %p39
        %p208 = pneg %p63
        %p209 = pneg %p60
        %p210 = pneg %p84
        %p211 = pneg %p81
        %p212 = pneg %p110
        %p213 = pneg %p107
        %s214 = sand.u32 %s97, 1
        %s215 = scalar_lea.sflag [#allocation4], %s214
        %s216 = sand.u32 %s97, 1
        %s217 = smul.addr %s216, 128
        %s218 = scalar_lea.vmem [#allocation8], %s217
        %s219 = smul.u32 4, %s21
        %s220 = smul.u32 16, %s21
        %v221 = vld [vmem:[%s188] sm:$0xff]
        %v222 = vld [vmem:[%s188 + $0x8] sm:$0xff]
        %v223 = vld [vmem:[%s188 + $0x10] sm:$0xff]
        %v224 = vld [vmem:[%s188 + $0x18] sm:$0xff]
        %v225 = vld [vmem:[%s188 + $0x20] sm:$0xff]
        %v226 = vld [vmem:[%s188 + $0x28] sm:$0xff]
        %v227 = vld [vmem:[%s188 + $0x30] sm:$0xff]
        %v228 = vld [vmem:[%s188 + $0x38] sm:$0xff]
        %229 = vxpose.xlu0.b32.start [1/16] %v221, 128
        %230 = vxpose.xlu0.b32.cont [2/16] %v222, 128
        %231 = vxpose.xlu0.b32.cont [3/16] 0.0, 128
        %232 = vxpose.xlu0.b32.cont [4/16] 0.0, 128
        %233 = vxpose.xlu0.b32.cont [5/16] 0.0, 128
        %234 = vxpose.xlu0.b32.cont [6/16] 0.0, 128
        %235 = vxpose.xlu0.b32.cont [7/16] 0.0, 128
        %236 = vxpose.xlu0.b32.cont [8/16] 0.0, 128
        %237 = vxpose.xlu0.b32.cont [9/16] 0.0, 128
        %238 = vxpose.xlu0.b32.cont [10/16] 0.0, 128
        %239 = vxpose.xlu0.b32.cont [11/16] 0.0, 128
        %240 = vxpose.xlu0.b32.cont [12/16] 0.0, 128
        %241 = vxpose.xlu0.b32.cont [13/16] 0.0, 128
        %242 = vxpose.xlu0.b32.cont [14/16] 0.0, 128
        %243 = vxpose.xlu0.b32.cont [15/16] 0.0, 128
        %244 = vxpose.xlu0.b32.end [16/16] 0.0, 128
        %v245 = vpop.trf.xlu0
        %v246 = vpop.trf.xlu0
        %v247 = vpop.trf.xlu0
        %v248 = vpop.trf.xlu0
        %v249 = vpop.trf.xlu0
        %v250 = vpop.trf.xlu0
        %v251 = vpop.trf.xlu0
        %v252 = vpop.trf.xlu0
        %v253 = vpop.trf.xlu0
        %v254 = vpop.trf.xlu0
        %v255 = vpop.trf.xlu0
        %v256 = vpop.trf.xlu0
        %v257 = vpop.trf.xlu0
        %v258 = vpop.trf.xlu0
        %v259 = vpop.trf.xlu0
        %v260 = vpop.trf.xlu0
        %261 = vxpose.xlu0.b32.start [1/16] %v223, 128
        %262 = vxpose.xlu0.b32.cont [2/16] %v224, 128
        %263 = vxpose.xlu0.b32.cont [3/16] 0.0, 128
        %264 = vxpose.xlu0.b32.cont [4/16] 0.0, 128
        %265 = vxpose.xlu0.b32.cont [5/16] 0.0, 128
        %266 = vxpose.xlu0.b32.cont [6/16] 0.0, 128
        %267 = vxpose.xlu0.b32.cont [7/16] 0.0, 128
        %268 = vxpose.xlu0.b32.cont [8/16] 0.0, 128
        %269 = vxpose.xlu0.b32.cont [9/16] 0.0, 128
        %270 = vxpose.xlu0.b32.cont [10/16] 0.0, 128
        %271 = vxpose.xlu0.b32.cont [11/16] 0.0, 128
        %272 = vxpose.xlu0.b32.cont [12/16] 0.0, 128
        %273 = vxpose.xlu0.b32.cont [13/16] 0.0, 128
        %274 = vxpose.xlu0.b32.cont [14/16] 0.0, 128
        %275 = vxpose.xlu0.b32.cont [15/16] 0.0, 128
        %276 = vxpose.xlu0.b32.end [16/16] 0.0, 128
        %v277 = vpop.trf.xlu0
        %v278 = vpop.trf.xlu0
        %v279 = vpop.trf.xlu0
        %v280 = vpop.trf.xlu0
        %v281 = vpop.trf.xlu0
        %v282 = vpop.trf.xlu0
        %v283 = vpop.trf.xlu0
        %v284 = vpop.trf.xlu0
        %v285 = vpop.trf.xlu0
        %v286 = vpop.trf.xlu0
        %v287 = vpop.trf.xlu0
        %v288 = vpop.trf.xlu0
        %v289 = vpop.trf.xlu0
        %v290 = vpop.trf.xlu0
        %v291 = vpop.trf.xlu0
        %v292 = vpop.trf.xlu0
        %293 = vxpose.xlu0.b32.start [1/16] %v225, 128
        %294 = vxpose.xlu0.b32.cont [2/16] %v226, 128
        %295 = vxpose.xlu0.b32.cont [3/16] 0.0, 128
        %296 = vxpose.xlu0.b32.cont [4/16] 0.0, 128
        %297 = vxpose.xlu0.b32.cont [5/16] 0.0, 128
        %298 = vxpose.xlu0.b32.cont [6/16] 0.0, 128
        %299 = vxpose.xlu0.b32.cont [7/16] 0.0, 128
        %300 = vxpose.xlu0.b32.cont [8/16] 0.0, 128
        %301 = vxpose.xlu0.b32.cont [9/16] 0.0, 128
        %302 = vxpose.xlu0.b32.cont [10/16] 0.0, 128
        %303 = vxpose.xlu0.b32.cont [11/16] 0.0, 128
        %304 = vxpose.xlu0.b32.cont [12/16] 0.0, 128
        %305 = vxpose.xlu0.b32.cont [13/16] 0.0, 128
        %306 = vxpose.xlu0.b32.cont [14/16] 0.0, 128
        %307 = vxpose.xlu0.b32.cont [15/16] 0.0, 128
        %308 = vxpose.xlu0.b32.end [16/16] 0.0, 128
        %v309 = vpop.trf.xlu0
        %v310 = vpop.trf.xlu0
        %v311 = vpop.trf.xlu0
        %v312 = vpop.trf.xlu0
        %v313 = vpop.trf.xlu0
        %v314 = vpop.trf.xlu0
        %v315 = vpop.trf.xlu0
        %v316 = vpop.trf.xlu0
        %v317 = vpop.trf.xlu0
        %v318 = vpop.trf.xlu0
        %v319 = vpop.trf.xlu0
        %v320 = vpop.trf.xlu0
        %v321 = vpop.trf.xlu0
        %v322 = vpop.trf.xlu0
        %v323 = vpop.trf.xlu0
        %v324 = vpop.trf.xlu0
        %325 = vxpose.xlu0.b32.start [1/16] %v227, 128
        %326 = vxpose.xlu0.b32.cont [2/16] %v228, 128
        %327 = vxpose.xlu0.b32.cont [3/16] 0.0, 128
        %328 = vxpose.xlu0.b32.cont [4/16] 0.0, 128
        %329 = vxpose.xlu0.b32.cont [5/16] 0.0, 128
        %330 = vxpose.xlu0.b32.cont [6/16] 0.0, 128
        %331 = vxpose.xlu0.b32.cont [7/16] 0.0, 128
        %332 = vxpose.xlu0.b32.cont [8/16] 0.0, 128
        %333 = vxpose.xlu0.b32.cont [9/16] 0.0, 128
        %334 = vxpose.xlu0.b32.cont [10/16] 0.0, 128
        %335 = vxpose.xlu0.b32.cont [11/16] 0.0, 128
        %336 = vxpose.xlu0.b32.cont [12/16] 0.0, 128
        %337 = vxpose.xlu0.b32.cont [13/16] 0.0, 128
        %338 = vxpose.xlu0.b32.cont [14/16] 0.0, 128
        %339 = vxpose.xlu0.b32.cont [15/16] 0.0, 128
        %340 = vxpose.xlu0.b32.end [16/16] 0.0, 128
        %v341 = vpop.trf.xlu0
        %v342 = vpop.trf.xlu0
        %v343 = vpop.trf.xlu0
        %v344 = vpop.trf.xlu0
        %v345 = vpop.trf.xlu0
        %v346 = vpop.trf.xlu0
        %v347 = vpop.trf.xlu0
        %v348 = vpop.trf.xlu0
        %v349 = vpop.trf.xlu0
        %v350 = vpop.trf.xlu0
        %v351 = vpop.trf.xlu0
        %v352 = vpop.trf.xlu0
        %v353 = vpop.trf.xlu0
        %v354 = vpop.trf.xlu0
        %v355 = vpop.trf.xlu0
        %v356 = vpop.trf.xlu0
        %v357 = vld [vmem:[#allocation5] sm:$0xff]
        %v358 = vld [vmem:[#allocation5 + $0x8] sm:$0xff]
        %vm359 = vcmask 130048
        %v361 = vsel %vm359, %v245, 0
        %v364 = vsel %vm359, %v246, 0
        %v367 = vsel %vm359, %v277, 0
        %v370 = vsel %vm359, %v278, 0
        %v373 = vsel %vm359, %v309, 0
        %v376 = vsel %vm359, %v310, 0
        %v379 = vsel %vm359, %v341, 0
        %v382 = vsel %vm359, %v342, 0
        %384 = vmatprep.subr.mxu0 0.0
        %385 = vmatpush1.msra.mxu0 0.0
        %386 = vmatprep.subr.mxu0 0.0
        %387 = vmatpush1.msra.mxu0 0.0
        %388 = vmatprep.subr.mxu0 0.0
        %389 = vmatpush1.msra.mxu0 0.0
        %390 = vmatprep.subr.mxu0 0.0
        %391 = vmatpush1.msra.mxu0 0.0
        %392 = vmatprep.subr.mxu0 0.0
        %393 = vmatpush1.msra.mxu0 0.0
        %394 = vmatprep.subr.mxu0 0.0
        %395 = vmatpush1.msra.mxu0 0.0
        %396 = vmatprep.subr.mxu0 0.0
        %397 = vmatpush1.msra.mxu0 0.0
        %398 = vmatprep.subr.mxu0 0.0
        %399 = vmatpush1.msra.mxu0 0.0
        %400 = vmatprep.subr.mxu0 0.0
        %401 = vmatpush1.msra.mxu0 0.0
        %402 = vmatprep.subr.mxu0 0.0
        %403 = vmatpush1.msra.mxu0 0.0
        %404 = vmatprep.subr.mxu0 0.0
        %405 = vmatpush1.msra.mxu0 0.0
        %406 = vmatprep.subr.mxu0 0.0
        %407 = vmatpush1.msra.mxu0 0.0
        %408 = vmatprep.subr.mxu0 0.0
        %409 = vmatpush1.msra.mxu0 0.0
        %410 = vmatprep.subr.mxu0 0.0
        %411 = vmatpush1.msra.mxu0 0.0
        %412 = vmatprep.subr.mxu0 0.0
        %413 = vmatpush1.msra.mxu0 %v358
        %414 = vmatprep.subr.mxu0 0.0
        %415 = vmatpush1.msra.mxu0 %v357
        %416 = vmatprep.subr.mxu0 0.0
        %417 = vmatpush2.msra.mxu0 0.0
        %418 = vmatprep.subr.mxu0 0.0
        %419 = vmatpush2.msra.mxu0 0.0
        %420 = vmatprep.subr.mxu0 0.0
        %421 = vmatpush2.msra.mxu0 0.0
        %422 = vmatprep.subr.mxu0 0.0
        %423 = vmatpush2.msra.mxu0 0.0
        %424 = vmatprep.subr.mxu0 0.0
        %425 = vmatpush2.msra.mxu0 0.0
        %426 = vmatprep.subr.mxu0 0.0
        %427 = vmatpush2.msra.mxu0 0.0
        %428 = vmatprep.subr.mxu0 0.0
        %429 = vmatpush2.msra.mxu0 0.0
        %430 = vmatprep.subr.mxu0 0.0
        %431 = vmatpush2.msra.mxu0 0.0
        %432 = vmatprep.subr.mxu0 0.0
        %433 = vmatpush2.msra.mxu0 0.0
        %434 = vmatprep.subr.mxu0 0.0
        %435 = vmatpush2.msra.mxu0 0.0
        %436 = vmatprep.subr.mxu0 0.0
        %437 = vmatpush2.msra.mxu0 0.0
        %438 = vmatprep.subr.mxu0 0.0
        %439 = vmatpush2.msra.mxu0 0.0
        %440 = vmatprep.subr.mxu0 0.0
        %441 = vmatpush2.msra.mxu0 0.0
        %442 = vmatprep.subr.mxu0 0.0
        %443 = vmatpush2.msra.mxu0 0.0
        %444 = vmatprep.subr.mxu0 0.0
        %445 = vmatpush2.msra.mxu0 0.0
        %446 = vmatprep.subr.mxu0 0.0
        %447 = vmatpush2.msra.mxu0 0.0
        %448 = vmatprep.mubr.f32.mxu0 0.0
        %449 = vmatmul.mubr.f32.gmra.mxu0 %v361
        %v450 = vpop.f32.mrf.mxu0
        %v451 = vadd.f32 0.0, %v450
        %v452 = vpop.f32.mrf.mxu0
        %453 = vmatprep.mubr.f32.mxu0 0.0
        %454 = vmatmul.mubr.f32.gmra.mxu0 %v364
        %v455 = vpop.f32.mrf.mxu0
        %v456 = vadd.f32 0.0, %v455
        %v457 = vpop.f32.mrf.mxu0
        %458 = vmatprep.mubr.f32.mxu0 0.0
        %459 = vmatmul.mubr.f32.gmra.mxu0 %v367
        %v460 = vpop.f32.mrf.mxu0
        %v461 = vadd.f32 0.0, %v460
        %v462 = vpop.f32.mrf.mxu0
        %463 = vmatprep.mubr.f32.mxu0 0.0
        %464 = vmatmul.mubr.f32.gmra.mxu0 %v370
        %v465 = vpop.f32.mrf.mxu0
        %v466 = vadd.f32 0.0, %v465
        %v467 = vpop.f32.mrf.mxu0
        %468 = vmatprep.mubr.f32.mxu0 0.0
        %469 = vmatmul.mubr.f32.gmra.mxu0 %v373
        %v470 = vpop.f32.mrf.mxu0
        %v471 = vadd.f32 0.0, %v470
        %v472 = vpop.f32.mrf.mxu0
        %473 = vmatprep.mubr.f32.mxu0 0.0
        %474 = vmatmul.mubr.f32.gmra.mxu0 %v376
        %v475 = vpop.f32.mrf.mxu0
        %v476 = vadd.f32 0.0, %v475
        %v477 = vpop.f32.mrf.mxu0
        %478 = vmatprep.mubr.f32.mxu0 0.0
        %479 = vmatmul.mubr.f32.gmra.mxu0 %v379
        %v480 = vpop.f32.mrf.mxu0
        %v481 = vadd.f32 0.0, %v480
        %v482 = vpop.f32.mrf.mxu0
        %483 = vmatprep.mubr.f32.mxu0 0.0
        %484 = vmatmul.mubr.f32.gmra.mxu0 %v382
        %v485 = vpop.f32.mrf.mxu0
        %v486 = vadd.f32 0.0, %v485
        %v487 = vpop.f32.mrf.mxu0
        %488 = vdwg.mxu0
        %489 = vxpose.xlu0.b32.start [1/16] %v451, 128
        %490 = vxpose.xlu0.b32.cont [2/16] %v456, 128
        %491 = vxpose.xlu0.b32.cont [3/16] 0.0, 128
        %492 = vxpose.xlu0.b32.cont [4/16] 0.0, 128
        %493 = vxpose.xlu0.b32.cont [5/16] 0.0, 128
        %494 = vxpose.xlu0.b32.cont [6/16] 0.0, 128
        %495 = vxpose.xlu0.b32.cont [7/16] 0.0, 128
        %496 = vxpose.xlu0.b32.cont [8/16] 0.0, 128
        %497 = vxpose.xlu0.b32.cont [9/16] 0.0, 128
        %498 = vxpose.xlu0.b32.cont [10/16] 0.0, 128
        %499 = vxpose.xlu0.b32.cont [11/16] 0.0, 128
        %500 = vxpose.xlu0.b32.cont [12/16] 0.0, 128
        %501 = vxpose.xlu0.b32.cont [13/16] 0.0, 128
        %502 = vxpose.xlu0.b32.cont [14/16] 0.0, 128
        %503 = vxpose.xlu0.b32.cont [15/16] 0.0, 128
        %504 = vxpose.xlu0.b32.end [16/16] 0.0, 128
        %v505 = vpop.trf.xlu0
        %v506 = vpop.trf.xlu0
        %v507 = vpop.trf.xlu0
        %v508 = vpop.trf.xlu0
        %v509 = vpop.trf.xlu0
        %v510 = vpop.trf.xlu0
        %v511 = vpop.trf.xlu0
        %v512 = vpop.trf.xlu0
        %v513 = vpop.trf.xlu0
        %v514 = vpop.trf.xlu0
        %v515 = vpop.trf.xlu0
        %v516 = vpop.trf.xlu0
        %v517 = vpop.trf.xlu0
        %v518 = vpop.trf.xlu0
        %v519 = vpop.trf.xlu0
        %v520 = vpop.trf.xlu0
        %521 = vxpose.xlu0.b32.start [1/16] %v461, 128
        %522 = vxpose.xlu0.b32.cont [2/16] %v466, 128
        %523 = vxpose.xlu0.b32.cont [3/16] 0.0, 128
        %524 = vxpose.xlu0.b32.cont [4/16] 0.0, 128
        %525 = vxpose.xlu0.b32.cont [5/16] 0.0, 128
        %526 = vxpose.xlu0.b32.cont [6/16] 0.0, 128
        %527 = vxpose.xlu0.b32.cont [7/16] 0.0, 128
        %528 = vxpose.xlu0.b32.cont [8/16] 0.0, 128
        %529 = vxpose.xlu0.b32.cont [9/16] 0.0, 128
        %530 = vxpose.xlu0.b32.cont [10/16] 0.0, 128
        %531 = vxpose.xlu0.b32.cont [11/16] 0.0, 128
        %532 = vxpose.xlu0.b32.cont [12/16] 0.0, 128
        %533 = vxpose.xlu0.b32.cont [13/16] 0.0, 128
        %534 = vxpose.xlu0.b32.cont [14/16] 0.0, 128
        %535 = vxpose.xlu0.b32.cont [15/16] 0.0, 128
        %536 = vxpose.xlu0.b32.end [16/16] 0.0, 128
        %v537 = vpop.trf.xlu0
        %v538 = vpop.trf.xlu0
        %v539 = vpop.trf.xlu0
        %v540 = vpop.trf.xlu0
        %v541 = vpop.trf.xlu0
        %v542 = vpop.trf.xlu0
        %v543 = vpop.trf.xlu0
        %v544 = vpop.trf.xlu0
        %v545 = vpop.trf.xlu0
        %v546 = vpop.trf.xlu0
        %v547 = vpop.trf.xlu0
        %v548 = vpop.trf.xlu0
        %v549 = vpop.trf.xlu0
        %v550 = vpop.trf.xlu0
        %v551 = vpop.trf.xlu0
        %v552 = vpop.trf.xlu0
        %553 = vxpose.xlu0.b32.start [1/16] %v471, 128
        %554 = vxpose.xlu0.b32.cont [2/16] %v476, 128
        %555 = vxpose.xlu0.b32.cont [3/16] 0.0, 128
        %556 = vxpose.xlu0.b32.cont [4/16] 0.0, 128
        %557 = vxpose.xlu0.b32.cont [5/16] 0.0, 128
        %558 = vxpose.xlu0.b32.cont [6/16] 0.0, 128
        %559 = vxpose.xlu0.b32.cont [7/16] 0.0, 128
        %560 = vxpose.xlu0.b32.cont [8/16] 0.0, 128
        %561 = vxpose.xlu0.b32.cont [9/16] 0.0, 128
        %562 = vxpose.xlu0.b32.cont [10/16] 0.0, 128
        %563 = vxpose.xlu0.b32.cont [11/16] 0.0, 128
        %564 = vxpose.xlu0.b32.cont [12/16] 0.0, 128
        %565 = vxpose.xlu0.b32.cont [13/16] 0.0, 128
        %566 = vxpose.xlu0.b32.cont [14/16] 0.0, 128
        %567 = vxpose.xlu0.b32.cont [15/16] 0.0, 128
        %568 = vxpose.xlu0.b32.end [16/16] 0.0, 128
        %v569 = vpop.trf.xlu0
        %v570 = vpop.trf.xlu0
        %v571 = vpop.trf.xlu0
        %v572 = vpop.trf.xlu0
        %v573 = vpop.trf.xlu0
        %v574 = vpop.trf.xlu0
        %v575 = vpop.trf.xlu0
        %v576 = vpop.trf.xlu0
        %v577 = vpop.trf.xlu0
        %v578 = vpop.trf.xlu0
        %v579 = vpop.trf.xlu0
        %v580 = vpop.trf.xlu0
        %v581 = vpop.trf.xlu0
        %v582 = vpop.trf.xlu0
        %v583 = vpop.trf.xlu0
        %v584 = vpop.trf.xlu0
        %585 = vxpose.xlu0.b32.start [1/16] %v481, 128
        %586 = vxpose.xlu0.b32.cont [2/16] %v486, 128
        %587 = vxpose.xlu0.b32.cont [3/16] 0.0, 128
        %588 = vxpose.xlu0.b32.cont [4/16] 0.0, 128
        %589 = vxpose.xlu0.b32.cont [5/16] 0.0, 128
        %590 = vxpose.xlu0.b32.cont [6/16] 0.0, 128
        %591 = vxpose.xlu0.b32.cont [7/16] 0.0, 128
        %592 = vxpose.xlu0.b32.cont [8/16] 0.0, 128
        %593 = vxpose.xlu0.b32.cont [9/16] 0.0, 128
        %594 = vxpose.xlu0.b32.cont [10/16] 0.0, 128
        %595 = vxpose.xlu0.b32.cont [11/16] 0.0, 128
        %596 = vxpose.xlu0.b32.cont [12/16] 0.0, 128
        %597 = vxpose.xlu0.b32.cont [13/16] 0.0, 128
        %598 = vxpose.xlu0.b32.cont [14/16] 0.0, 128
        %599 = vxpose.xlu0.b32.cont [15/16] 0.0, 128
        %600 = vxpose.xlu0.b32.end [16/16] 0.0, 128
        %v601 = vpop.trf.xlu0
        %v602 = vpop.trf.xlu0
        %v603 = vpop.trf.xlu0
        %v604 = vpop.trf.xlu0
        %v605 = vpop.trf.xlu0
        %v606 = vpop.trf.xlu0
        %v607 = vpop.trf.xlu0
        %v608 = vpop.trf.xlu0
        %v609 = vpop.trf.xlu0
        %v610 = vpop.trf.xlu0
        %v611 = vpop.trf.xlu0
        %v612 = vpop.trf.xlu0
        %v613 = vpop.trf.xlu0
        %v614 = vpop.trf.xlu0
        %v615 = vpop.trf.xlu0
        %v616 = vpop.trf.xlu0
        %v617 = vld [vmem:[#allocation7] sm:$0xff]
        %v618 = vld [vmem:[#allocation7 + $0x8] sm:$0xff]
        %v620 = vsel %vm359, %v505, 0
        %v623 = vsel %vm359, %v506, 0
        %v626 = vsel %vm359, %v507, 0
        %v629 = vsel %vm359, %v508, 0
        %v632 = vsel %vm359, %v537, 0
        %v635 = vsel %vm359, %v538, 0
        %v638 = vsel %vm359, %v539, 0
        %v641 = vsel %vm359, %v540, 0
        %v644 = vsel %vm359, %v569, 0
        %v647 = vsel %vm359, %v570, 0
        %v650 = vsel %vm359, %v571, 0
        %v653 = vsel %vm359, %v572, 0
        %v656 = vsel %vm359, %v601, 0
        %v659 = vsel %vm359, %v602, 0
        %v662 = vsel %vm359, %v603, 0
        %v665 = vsel %vm359, %v604, 0
        %667 = vmatprep.subr.mxu0 0.0
        %668 = vmatpush1.msra.mxu0 0.0
        %669 = vmatprep.subr.mxu0 0.0
        %670 = vmatpush1.msra.mxu0 0.0
        %671 = vmatprep.subr.mxu0 0.0
        %672 = vmatpush1.msra.mxu0 0.0
        %673 = vmatprep.subr.mxu0 0.0
        %674 = vmatpush1.msra.mxu0 0.0
        %675 = vmatprep.subr.mxu0 0.0
        %676 = vmatpush1.msra.mxu0 0.0
        %677 = vmatprep.subr.mxu0 0.0
        %678 = vmatpush1.msra.mxu0 0.0
        %679 = vmatprep.subr.mxu0 0.0
        %680 = vmatpush1.msra.mxu0 0.0
        %681 = vmatprep.subr.mxu0 0.0
        %682 = vmatpush1.msra.mxu0 0.0
        %683 = vmatprep.subr.mxu0 0.0
        %684 = vmatpush1.msra.mxu0 0.0
        %685 = vmatprep.subr.mxu0 0.0
        %686 = vmatpush1.msra.mxu0 0.0
        %687 = vmatprep.subr.mxu0 0.0
        %688 = vmatpush1.msra.mxu0 0.0
        %689 = vmatprep.subr.mxu0 0.0
        %690 = vmatpush1.msra.mxu0 0.0
        %691 = vmatprep.subr.mxu0 0.0
        %692 = vmatpush1.msra.mxu0 0.0
        %693 = vmatprep.subr.mxu0 0.0
        %694 = vmatpush1.msra.mxu0 0.0
        %695 = vmatprep.subr.mxu0 0.0
        %696 = vmatpush1.msra.mxu0 %v618
        %697 = vmatprep.subr.mxu0 0.0
        %698 = vmatpush1.msra.mxu0 %v617
        %699 = vmatprep.subr.mxu0 0.0
        %700 = vmatpush2.msra.mxu0 0.0
        %701 = vmatprep.subr.mxu0 0.0
        %702 = vmatpush2.msra.mxu0 0.0
        %703 = vmatprep.subr.mxu0 0.0
        %704 = vmatpush2.msra.mxu0 0.0
        %705 = vmatprep.subr.mxu0 0.0
        %706 = vmatpush2.msra.mxu0 0.0
        %707 = vmatprep.subr.mxu0 0.0
        %708 = vmatpush2.msra.mxu0 0.0
        %709 = vmatprep.subr.mxu0 0.0
        %710 = vmatpush2.msra.mxu0 0.0
        %711 = vmatprep.subr.mxu0 0.0
        %712 = vmatpush2.msra.mxu0 0.0
        %713 = vmatprep.subr.mxu0 0.0
        %714 = vmatpush2.msra.mxu0 0.0
        %715 = vmatprep.subr.mxu0 0.0
        %716 = vmatpush2.msra.mxu0 0.0
        %717 = vmatprep.subr.mxu0 0.0
        %718 = vmatpush2.msra.mxu0 0.0
        %719 = vmatprep.subr.mxu0 0.0
        %720 = vmatpush2.msra.mxu0 0.0
        %721 = vmatprep.subr.mxu0 0.0
        %722 = vmatpush2.msra.mxu0 0.0
        %723 = vmatprep.subr.mxu0 0.0
        %724 = vmatpush2.msra.mxu0 0.0
        %725 = vmatprep.subr.mxu0 0.0
        %726 = vmatpush2.msra.mxu0 0.0
        %727 = vmatprep.subr.mxu0 0.0
        %728 = vmatpush2.msra.mxu0 0.0
        %729 = vmatprep.subr.mxu0 0.0
        %730 = vmatpush2.msra.mxu0 0.0
        %731 = vmatprep.mubr.f32.mxu0 0.0
        %732 = vmatmul.mubr.f32.gmra.mxu0 %v620
        %v733 = vpop.f32.mrf.mxu0
        %v734 = vadd.f32 0.0, %v733
        %v735 = vpop.f32.mrf.mxu0
        %736 = vmatprep.mubr.f32.mxu0 0.0
        %737 = vmatmul.mubr.f32.gmra.mxu0 %v623
        %v738 = vpop.f32.mrf.mxu0
        %v739 = vadd.f32 0.0, %v738
        %v740 = vpop.f32.mrf.mxu0
        %741 = vmatprep.mubr.f32.mxu0 0.0
        %742 = vmatmul.mubr.f32.gmra.mxu0 %v626
        %v743 = vpop.f32.mrf.mxu0
        %v744 = vadd.f32 0.0, %v743
        %v745 = vpop.f32.mrf.mxu0
        %746 = vmatprep.mubr.f32.mxu0 0.0
        %747 = vmatmul.mubr.f32.gmra.mxu0 %v629
        %v748 = vpop.f32.mrf.mxu0
        %v749 = vadd.f32 0.0, %v748
        %v750 = vpop.f32.mrf.mxu0
        %751 = vmatprep.mubr.f32.mxu0 0.0
        %752 = vmatmul.mubr.f32.gmra.mxu0 %v632
        %v753 = vpop.f32.mrf.mxu0
        %v754 = vadd.f32 0.0, %v753
        %v755 = vpop.f32.mrf.mxu0
        %756 = vmatprep.mubr.f32.mxu0 0.0
        %757 = vmatmul.mubr.f32.gmra.mxu0 %v635
        %v758 = vpop.f32.mrf.mxu0
        %v759 = vadd.f32 0.0, %v758
        %v760 = vpop.f32.mrf.mxu0
        %761 = vmatprep.mubr.f32.mxu0 0.0
        %762 = vmatmul.mubr.f32.gmra.mxu0 %v638
        %v763 = vpop.f32.mrf.mxu0
        %v764 = vadd.f32 0.0, %v763
        %v765 = vpop.f32.mrf.mxu0
        %766 = vmatprep.mubr.f32.mxu0 0.0
        %767 = vmatmul.mubr.f32.gmra.mxu0 %v641
        %v768 = vpop.f32.mrf.mxu0
        %v769 = vadd.f32 0.0, %v768
        %v770 = vpop.f32.mrf.mxu0
        %771 = vmatprep.mubr.f32.mxu0 0.0
        %772 = vmatmul.mubr.f32.gmra.mxu0 %v644
        %v773 = vpop.f32.mrf.mxu0
        %v774 = vadd.f32 0.0, %v773
        %v775 = vpop.f32.mrf.mxu0
        %776 = vmatprep.mubr.f32.mxu0 0.0
        %777 = vmatmul.mubr.f32.gmra.mxu0 %v647
        %v778 = vpop.f32.mrf.mxu0
        %v779 = vadd.f32 0.0, %v778
        %v780 = vpop.f32.mrf.mxu0
        %781 = vmatprep.mubr.f32.mxu0 0.0
        %782 = vmatmul.mubr.f32.gmra.mxu0 %v650
        %v783 = vpop.f32.mrf.mxu0
        %v784 = vadd.f32 0.0, %v783
        %v785 = vpop.f32.mrf.mxu0
        %786 = vmatprep.mubr.f32.mxu0 0.0
        %787 = vmatmul.mubr.f32.gmra.mxu0 %v653
        %v788 = vpop.f32.mrf.mxu0
        %v789 = vadd.f32 0.0, %v788
        %v790 = vpop.f32.mrf.mxu0
        %791 = vmatprep.mubr.f32.mxu0 0.0
        %792 = vmatmul.mubr.f32.gmra.mxu0 %v656
        %v793 = vpop.f32.mrf.mxu0
        %v794 = vadd.f32 0.0, %v793
        %v795 = vpop.f32.mrf.mxu0
        %796 = vmatprep.mubr.f32.mxu0 0.0
        %797 = vmatmul.mubr.f32.gmra.mxu0 %v659
        %v798 = vpop.f32.mrf.mxu0
        %v799 = vadd.f32 0.0, %v798
        %v800 = vpop.f32.mrf.mxu0
        %801 = vmatprep.mubr.f32.mxu0 0.0
        %802 = vmatmul.mubr.f32.gmra.mxu0 %v662
        %v803 = vpop.f32.mrf.mxu0
        %v804 = vadd.f32 0.0, %v803
        %v805 = vpop.f32.mrf.mxu0
        %806 = vmatprep.mubr.f32.mxu0 0.0
        %807 = vmatmul.mubr.f32.gmra.mxu0 %v665
        %v808 = vpop.f32.mrf.mxu0
        %v809 = vadd.f32 0.0, %v808
        %v810 = vpop.f32.mrf.mxu0
        %811 = vdwg.mxu0
        %vm812 = vcmask 261120
        %813 = vst.msk [vmem:[%s218] sm:$0xff] %vm812, %v734
        %814 = vst.msk [vmem:[%s218 + $0x8] sm:$0xff] %vm812, %v739
        %815 = vst.msk [vmem:[%s218 + $0x10] sm:$0xff] %vm812, %v744
        %816 = vst.msk [vmem:[%s218 + $0x18] sm:$0xff] %vm812, %v749
        %817 = vst.msk [vmem:[%s218 + $0x20] sm:$0xff] %vm812, %v754
        %818 = vst.msk [vmem:[%s218 + $0x28] sm:$0xff] %vm812, %v759
        %819 = vst.msk [vmem:[%s218 + $0x30] sm:$0xff] %vm812, %v764
        %820 = vst.msk [vmem:[%s218 + $0x38] sm:$0xff] %vm812, %v769
        %821 = vst.msk [vmem:[%s218 + $0x40] sm:$0xff] %vm812, %v774
        %822 = vst.msk [vmem:[%s218 + $0x48] sm:$0xff] %vm812, %v779
        %823 = vst.msk [vmem:[%s218 + $0x50] sm:$0xff] %vm812, %v784
        %824 = vst.msk [vmem:[%s218 + $0x58] sm:$0xff] %vm812, %v789
        %825 = vst.msk [vmem:[%s218 + $0x60] sm:$0xff] %vm812, %v794
        %826 = vst.msk [vmem:[%s218 + $0x68] sm:$0xff] %vm812, %v799
        %827 = vst.msk [vmem:[%s218 + $0x70] sm:$0xff] %vm812, %v804
        %828 = vst.msk [vmem:[%s218 + $0x78] sm:$0xff] %vm812, %v809
        %s829 = sand.u32 %s97, 1
        %s830 = scalar_lea.sflag [#allocation4], %s829
        %s831 = sand.u32 %s97, 1
        %s832 = smul.addr %s831, 128
        %s833 = scalar_lea.vmem [#allocation8], %s832
        // Predicated region
        $region45: #{interpolate_bilinear.1} parent=31 // pred_check
          %p834 = pneg %p107
        $region46: #{interpolate_bilinear.1} parent=31 // pred_check_branch
          %836 = sbr.rel (%p834) target = $region48
        $region47: #{interpolate_bilinear.1} parent=31 // pred_region
          %s837 = smul.u32 16, %s21
          %s839 = ssub.s32 2048, 2048
          %840 = vsyncadd %s830, %s839
          %s841 = smul.addr %s837, 128
          %s842 = scalar_lea.hbm %s3, %s841
          %s843 = sshll.u32 %s833, 4
          %s844 = int_to_ptr.vmem [resolvable:$true] %s843
          %849 = dma.vmem_to_hbm [thread:$0]  %s844, 2048, %s842, %s830, 128, 128, 8
        $region48: #{interpolate_bilinear.1} parent=31 // pred_fallthru
          _
      $region32: #{interpolate_bilinear.1} parent=5 // pred_fallthru
        _
      %p850 = scmp.le.s32.totalorder 2, %s16
      // Predicated region
      $region49: #{interpolate_bilinear.1} parent=5 // pred_check
        %p851 = pneg %p850
      $region50: #{interpolate_bilinear.1} parent=5 // pred_check_branch
        %853 = sbr.rel (%p851) target = $region52
      $region51: #{interpolate_bilinear.1} parent=5 // pred_region
        %s854 = ssub.s32 %s16, 2
        // Predicated region
        $region53: #{interpolate_bilinear.1} parent=51 // pred_check
          %p855 = pneg %p113
        $region54: #{interpolate_bilinear.1} parent=51 // pred_check_branch
          %857 = sbr.rel (%p855) target = $region56
        $region55: #{interpolate_bilinear.1} parent=51 // pred_region
          %s858 = sand.u32 %s98, 1
          %s859 = scalar_lea.sflag [#allocation4], %s858
          %s860 = sand.u32 %s98, 1
          %s861 = smul.addr %s860, 128
          %s862 = scalar_lea.vmem [#allocation8], %s861
          %863 = dma.done %s859, 2048
        $region56: #{interpolate_bilinear.1} parent=51 // pred_fallthru
          _
      $region52: #{interpolate_bilinear.1} parent=5 // pred_fallthru
        _
    $region6: #{interpolate_bilinear.1} parent=1 // loop_footer
      %s20 = sadd.s32 1, %s16
    $region7: #{interpolate_bilinear.1} parent=1 // loop_footer_branch
      %15 = sbr.rel target = $region3
    $region8: #{interpolate_bilinear.1} parent=1 // loop_exit
      _
    %864 = vsyncpa [#allocation3], 1
    %s865 = scalar_lea.sflag [#allocation3], 1
    %866 = vsyncpa %s865, 1
    %867 = vsyncpa [#allocation6], 1
    %868 = vsyncpa [#allocation4], 1
    %s869 = scalar_lea.sflag [#allocation4], 1
    %870 = vsyncpa %s869, 1

</llo_original>
